<compile_context>
chip_gen: v5e
topology: v5e:2x2
jax: 0.10.0
libtpu: 0.0.40
codegen_flags: <defaults>
</compile_context>

<pallas_src>
import jax
import jax.numpy as jnp
from jax.experimental import pallas as pl
from jax.experimental.pallas import tpu as pltpu

HIDDEN = 128
BN_EPS = 1e-5


def _round_up(x, m):
    return (x + m - 1) // m * m


# ---------------------------------------------------------------------------
# Prologue: row-tiled  y = x @ W  (MXU) + per-channel sum / sum-of-squares
# accumulated across the sequential ("arbitrary") row grid.
# Called once for query (W1q) and once for supp (W1s).
# ---------------------------------------------------------------------------
def _linear_stats_kernel(x_ref, w_ref, y_ref, sum_ref, ssq_ref):
    y = jnp.dot(x_ref[...], w_ref[...], preferred_element_type=jnp.float32)
    y_ref[...] = y

    @pl.when(pl.program_id(0) == 0)
    def _():
        sum_ref[...] = jnp.zeros_like(sum_ref)
        ssq_ref[...] = jnp.zeros_like(ssq_ref)

    sum_ref[...] += jnp.sum(y, axis=0, keepdims=True)
    ssq_ref[...] += jnp.sum(y * y, axis=0, keepdims=True)


def _linear_with_stats(x, w, row_tile):
    rows, d = x.shape
    return pl.pallas_call(
        _linear_stats_kernel,
        out_shape=(jax.ShapeDtypeStruct((rows, HIDDEN), jnp.float32),
                   jax.ShapeDtypeStruct((1, HIDDEN), jnp.float32),
                   jax.ShapeDtypeStruct((1, HIDDEN), jnp.float32)),
        grid=(rows // row_tile,),
        in_specs=[pl.BlockSpec((row_tile, d), lambda i: (i, 0)),
                  pl.BlockSpec((d, HIDDEN), lambda i: (0, 0))],      # resident
        out_specs=(pl.BlockSpec((row_tile, HIDDEN), lambda i: (i, 0)),
                   pl.BlockSpec((1, HIDDEN), lambda i: (0, 0)),      # accumulators
                   pl.BlockSpec((1, HIDDEN), lambda i: (0, 0))),
        compiler_params=pltpu.CompilerParams(
            dimension_semantics=("arbitrary",)),
    )(x, w)


# ---------------------------------------------------------------------------
# Epilogue: per (tq, ts) output tile, accumulate over the 128 hidden channels
# into a lane-dense f32 accumulator.  Per channel and per result vreg:
#   add (lane-replicated qs col + sublane-replicated sbT row), relu,
#   scalar-scale by w2[c], accumulate  -> pure VPU work, no lane reduction,
#   no (tq, ts, 128) temporaries, single full-width store at the end.
# ---------------------------------------------------------------------------
def _epilogue_kernel(qs_ref, sbT_ref, w2_ref, b2_ref, out_ref):
    tq = qs_ref.shape[0]
    ts = sbT_ref.shape[1]
    acc = jnp.zeros((tq, ts), jnp.float32) + b2_ref[0, 0]
    for c in range(HIDDEN):                     # static unroll over channels
        qcol = qs_ref[:, c:c + 1]               # (tq, 1)  lane-replicated
        srow = sbT_ref[c:c + 1, :]              # (1, ts)  sublane-replicated
        t = qcol + srow                         # (tq, ts) broadcast add
        acc = acc + jnp.maximum(t, 0.0) * w2_ref[c]
    # sigmoid: exp goes to the EUP; one divide per output element is amortized
    # over the 128-channel accumulation above.
    out_ref[...] = 1.0 / (1.0 + jnp.exp(-acc))


def pairwise_distance_scaler(query, supp, params, *, tq=128, ts=256):
    """query: (Q, D), supp: (S, D)  ->  (Q, S) float32."""
    Q, D = query.shape
    S, Ds = supp.shape
    assert D == Ds
    w1q, w1s, b1, gamma, beta, w2, b2 = params

    # tq multiple of 8 (sublanes), ts multiple of 128 (lanes -> unmasked vst).
    tq = min(_round_up(tq, 8), _round_up(Q, 8))
    ts = min(_round_up(ts, 128), _round_up(S, 128))
    Qp = _round_up(Q, tq)
    Sp = _round_up(S, ts)

    # Zero-pad input rows only: padded rows map to all-zero q1/s1 rows, which
    # contribute nothing to the sums, and the means divide by the true Q / S,
    # so the BN statistics are exact.  No-ops when shapes already divide.
    query_p = jnp.pad(query, ((0, Qp - Q), (0, 0))) if Qp > Q else query
    supp_p = jnp.pad(supp, ((0, Sp - S), (0, 0))) if Sp > S else supp

    q1, qsum, qssq = _linear_with_stats(query_p, w1q, tq)
    s1, ssum, sssq = _linear_with_stats(supp_p, w1s, ts)

    # O(HIDDEN) combine (plain JAX glue): analytic batch stats of
    # h = q1 + s1 + b1 over all Q*S pairs; fold BN affine into rank-1 pieces.
    mean_q = qsum * (1.0 / Q)
    mean_s = ssum * (1.0 / S)
    var_q = jnp.maximum(qssq * (1.0 / Q) - mean_q * mean_q, 0.0)
    var_s = jnp.maximum(sssq * (1.0 / S) - mean_s * mean_s, 0.0)
    mean = mean_q + mean_s + b1
    var = var_q + var_s
    scale = gamma * jax.lax.rsqrt(var + BN_EPS)
    biasf = (b1 - mean) * scale + beta

    qs = q1 * scale                               # (Qp, H)
    sbT = jnp.transpose(s1 * scale + biasf)       # (H, Sp): channels on sublanes

    # j (supp tiles) is the fastest grid axis -> the qs tile is not re-fetched.
    grid = (Qp // tq, Sp // ts)
    out = pl.pallas_call(
        _epilogue_kernel,
        out_shape=jax.ShapeDtypeStruct((Qp, Sp), jnp.float32),
        grid=grid,
        in_specs=[
            pl.BlockSpec((tq, HIDDEN), lambda i, j: (i, 0)),   # qs tile
            pl.BlockSpec((HIDDEN, ts), lambda i, j: (0, j)),   # sbT tile
            pl.BlockSpec(memory_space=pltpu.MemorySpace.SMEM),  # w2 (H,)
            pl.BlockSpec(memory_space=pltpu.MemorySpace.SMEM),  # b2 (1,1)
        ],
        out_specs=pl.BlockSpec((tq, ts), lambda i, j: (i, j)),  # lane-dense out
        compiler_params=pltpu.CompilerParams(
            dimension_semantics=("parallel", "parallel")),      # megacore v7x
    )(qs, sbT, w2.reshape(HIDDEN), b2)

    if Qp > Q or Sp > S:
        out = out[:Q, :S]
    return out


def init_params(key, dim):
    """Deterministic synthetic parameters matching the PyTorch module shapes."""
    k1, k2, k3, k4 = jax.random.split(key, 4)
    # nn.Linear(2*dim, 128): weight (128, 2*dim), bias (128,) -> split into the
    # query half (dim, 128) and the supp half (dim, 128).
    w1q = jax.random.normal(k1, (dim, HIDDEN), jnp.float32) * 0.1
    w1s = jax.random.normal(k2, (dim, HIDDEN), jnp.float32) * 0.1
    b1 = jax.random.normal(k3, (1, HIDDEN), jnp.float32) * 0.05
    # BatchNorm1d(128, affine=True) fresh init: gamma=1, beta=0.
    gamma = jnp.ones((1, HIDDEN), jnp.float32)
    beta = jnp.zeros((1, HIDDEN), jnp.float32)
    # nn.Linear(128, 1): weight (1, 128), bias (1,) -> stored as (1,128), (1,1).
    w2 = jax.random.normal(k4, (1, HIDDEN), jnp.float32) * 0.1
    b2 = jnp.full((1, 1), 0.01, jnp.float32)
    return (w1q, w1s, b1, gamma, beta, w2, b2)


def reference(query, supp, params):
    """Pure-JAX reference mirroring the PyTorch forward exactly."""
    w1q, w1s, b1, gamma, beta, w2, b2 = params
    Q, D = query.shape
    S = supp.shape[0]
    x = jnp.concatenate(
        [jnp.repeat(query[:, None, :], S, axis=1),
         jnp.repeat(supp[None, :, :], Q, axis=0)], axis=2).reshape(Q * S, 2 * D)
    W1 = jnp.concatenate([w1q, w1s], axis=0)          # (2D, 128)
    h = x @ W1 + b1[0]
    mean = h.mean(axis=0)
    var = ((h - mean) ** 2).mean(axis=0)              # biased, training-mode BN
    hn = (h - mean) / jnp.sqrt(var + BN_EPS) * gamma[0] + beta[0]
    hr = jnp.maximum(hn, 0.0)
    logits = hr @ w2[0] + b2[0, 0]
    return jax.nn.sigmoid(logits).reshape(Q, S)


if __name__ == "__main__":
    DIM = 32
    Q, S = 48, 320          # exercises multi-tile grids, padding and slicing

    key = jax.random.PRNGKey(0)
    kq, ks, kp = jax.random.split(key, 3)
    query = jax.random.normal(kq, (Q, DIM), jnp.float32)
    supp = jax.random.normal(ks, (S, DIM), jnp.float32)
    params = init_params(kp, DIM)

    # tq=16, ts=128 -> epilogue grid (3, 3); supp padded 320 -> 384 and sliced.
    out = pairwise_distance_scaler(query, supp, params, tq=16, ts=128)
    out = jax.block_until_ready(out)

    ref = reference(query, supp, params)
    assert out.shape == (Q, S), out.shape
    max_err = float(jnp.max(jnp.abs(out - ref)))
    assert jnp.allclose(out, ref, atol=1e-5, rtol=1e-5), max_err

    print("KERNEL_OK")
</pallas_src>

<mosaic_0001>
module attributes {stable_mosaic.version = 11 : i64} {
  func.func @_linear_stats_kernel(%arg0: i32, %arg1: memref<16x32xf32, #tpu.memory_space<vmem>>, %arg2: memref<32x128xf32, #tpu.memory_space<vmem>>, %arg3: memref<16x128xf32, #tpu.memory_space<vmem>>, %arg4: memref<1x128xf32, #tpu.memory_space<vmem>>, %arg5: memref<1x128xf32, #tpu.memory_space<vmem>>) attributes {dimension_semantics = [#tpu.dimension_semantics<arbitrary>], iteration_bounds = array<i64: 3>, scalar_prefetch = 0 : i64, scratch_operands = 0 : i64, tpu.core_type = #tpu.core_type<tc>, window_params = [{transform_indices = @transform_0, window_bounds = array<i64: 16, 32>}, {pipeline_mode = #tpu.pipeline_mode<synchronous>, transform_indices = @transform_1, window_bounds = array<i64: 32, 128>}, {transform_indices = @transform_2, window_bounds = array<i64: 16, 128>}, {pipeline_mode = #tpu.pipeline_mode<synchronous>, transform_indices = @transform_3, window_bounds = array<i64: 1, 128>}, {pipeline_mode = #tpu.pipeline_mode<synchronous>, transform_indices = @transform_4, window_bounds = array<i64: 1, 128>}]} {
    %c0 = arith.constant 0 : index
    %c0_0 = arith.constant 0 : index
    %0 = vector.load %arg1[%c0, %c0_0] : memref<16x32xf32, #tpu.memory_space<vmem>>, vector<16x32xf32>
    %c0_1 = arith.constant 0 : index
    %c0_2 = arith.constant 0 : index
    %1 = vector.load %arg2[%c0_1, %c0_2] : memref<32x128xf32, #tpu.memory_space<vmem>>, vector<32x128xf32>
    %cst = arith.constant dense<0.000000e+00> : vector<16x128xf32>
    %2 = tpu.matmul %0, %1, %cst {dimension_numbers = #tpu.dot_dimension_numbers<[1], [0], [0], [1], [0, 0, 1, 1], [], []>} : vector<16x32xf32>, vector<32x128xf32>, vector<16x128xf32> -> vector<16x128xf32>
    %c0_3 = arith.constant 0 : index
    %c0_4 = arith.constant 0 : index
    %3 = vector.load %arg3[%c0_3, %c0_4] : memref<16x128xf32, #tpu.memory_space<vmem>>, vector<16x128xf32>
    tpu.vector_store %arg3[%c0_3, %c0_4], %2 {strides = array<i32>} : memref<16x128xf32, #tpu.memory_space<vmem>>, vector<16x128xf32>,
    %c0_i32 = arith.constant 0 : i32
    %4 = arith.cmpi eq, %arg0, %c0_i32 : i32
    %5 = arith.extui %4 : i1 to i32
    %c0_i32_5 = arith.constant 0 : i32
    %6 = arith.cmpi ne, %5, %c0_i32_5 : i32
    scf.if %6 {
      %cst_16 = arith.constant 0.000000e+00 : f32
      %18 = vector.broadcast %cst_16 : f32 to vector<1x128xf32>
      %c0_17 = arith.constant 0 : index
      %c0_18 = arith.constant 0 : index
      %19 = vector.load %arg4[%c0_17, %c0_18] : memref<1x128xf32, #tpu.memory_space<vmem>>, vector<1x128xf32>
      tpu.vector_store %arg4[%c0_17, %c0_18], %18 {strides = array<i32>} : memref<1x128xf32, #tpu.memory_space<vmem>>, vector<1x128xf32>,
      %cst_19 = arith.constant 0.000000e+00 : f32
      %20 = vector.broadcast %cst_19 : f32 to vector<1x128xf32>
      %c0_20 = arith.constant 0 : index
      %c0_21 = arith.constant 0 : index
      %21 = vector.load %arg5[%c0_20, %c0_21] : memref<1x128xf32, #tpu.memory_space<vmem>>, vector<1x128xf32>
      tpu.vector_store %arg5[%c0_20, %c0_21], %20 {strides = array<i32>} : memref<1x128xf32, #tpu.memory_space<vmem>>, vector<1x128xf32>,
    } else {
    }
    %c0_6 = arith.constant 0 : index
    %c0_7 = arith.constant 0 : index
    %7 = vector.load %arg4[%c0_6, %c0_7] : memref<1x128xf32, #tpu.memory_space<vmem>>, vector<1x128xf32>
    %cst_8 = arith.constant dense<0.000000e+00> : vector<128xf32>
    %8 = vector.multi_reduction <add>, %2, %cst_8 [0] : vector<16x128xf32> to vector<128xf32>
    %9 = vector.shape_cast %8 : vector<128xf32> to vector<1x128xf32>
    %10 = arith.addf %7, %9 : vector<1x128xf32>
    %c0_9 = arith.constant 0 : index
    %c0_10 = arith.constant 0 : index
    %11 = vector.load %arg4[%c0_9, %c0_10] : memref<1x128xf32, #tpu.memory_space<vmem>>, vector<1x128xf32>
    tpu.vector_store %arg4[%c0_9, %c0_10], %10 {strides = array<i32>} : memref<1x128xf32, #tpu.memory_space<vmem>>, vector<1x128xf32>,
    %c0_11 = arith.constant 0 : index
    %c0_12 = arith.constant 0 : index
    %12 = vector.load %arg5[%c0_11, %c0_12] : memref<1x128xf32, #tpu.memory_space<vmem>>, vector<1x128xf32>
    %13 = arith.mulf %2, %2 : vector<16x128xf32>
    %cst_13 = arith.constant dense<0.000000e+00> : vector<128xf32>
    %14 = vector.multi_reduction <add>, %13, %cst_13 [0] : vector<16x128xf32> to vector<128xf32>
    %15 = vector.shape_cast %14 : vector<128xf32> to vector<1x128xf32>
    %16 = arith.addf %12, %15 : vector<1x128xf32>
    %c0_14 = arith.constant 0 : index
    %c0_15 = arith.constant 0 : index
    %17 = vector.load %arg5[%c0_14, %c0_15] : memref<1x128xf32, #tpu.memory_space<vmem>>, vector<1x128xf32>
    tpu.vector_store %arg5[%c0_14, %c0_15], %16 {strides = array<i32>} : memref<1x128xf32, #tpu.memory_space<vmem>>, vector<1x128xf32>,
    return
  }
  func.func @transform_0(%arg0: i32) -> (i32, i32) {
    %c0_i32 = arith.constant 0 : i32
    %c0_i32_0 = arith.constant 0 : i32
    return %arg0, %c0_i32 : i32, i32
  }
  func.func @transform_1(%arg0: i32) -> (i32, i32) {
    %c0_i32 = arith.constant 0 : i32
    %c0_i32_0 = arith.constant 0 : i32
    %c0_i32_1 = arith.constant 0 : i32
    return %c0_i32, %c0_i32_0 : i32, i32
  }
  func.func @transform_2(%arg0: i32) -> (i32, i32) {
    %c0_i32 = arith.constant 0 : i32
    %c0_i32_0 = arith.constant 0 : i32
    return %arg0, %c0_i32 : i32, i32
  }
  func.func @transform_3(%arg0: i32) -> (i32, i32) {
    %c0_i32 = arith.constant 0 : i32
    %c0_i32_0 = arith.constant 0 : i32
    %c0_i32_1 = arith.constant 0 : i32
    return %c0_i32, %c0_i32_0 : i32, i32
  }
  func.func @transform_4(%arg0: i32) -> (i32, i32) {
    %c0_i32 = arith.constant 0 : i32
    %c0_i32_0 = arith.constant 0 : i32
    %c0_i32_1 = arith.constant 0 : i32
    return %c0_i32, %c0_i32_0 : i32, i32
  }
}

</mosaic_0001>

<llo_original>
// kernel: tpu_custom_call.1
$region0: #{tpu_custom_call.1}
  #allocation0 [shape = 'u32[]', space=smem, size = 0x4, offset = 0x4, fixed_abs, tag = 'smem constant byte address 0x4 - core index']
  #allocation1 [shape = 'u32[72,128]{1,0:T(1,128)}', space=vmem, size = 0x9000, scoped, tag = 'internal scratch']
  %s0 = inlined_call_operand.vmem [shape: f32[48,32], index: 0, kind: input, shape index: {}]
  %s1 = inlined_call_operand.vmem [shape: f32[32,128], index: 1, kind: input, shape index: {}]
  %s2 = inlined_call_operand.hbm [shape: f32[48,128], index: 2, kind: output, shape index: {0}]
  %s3 = inlined_call_operand.hbm [shape: f32[1,128], index: 3, kind: output, shape index: {1}]
  %s4 = inlined_call_operand.hbm [shape: f32[1,128], index: 4, kind: output, shape index: {2}]
  %5 = xla_tuple %s2, %s3, %s4
  %s6 = sld [smem:[#allocation0]]
  $region61: #{tpu_custom_call.1} parent=0
    _
  %s8 = ssub.s32 1, %s6
  %s9 = scalar_select 0, %s8, %s6
  $region1: #{tpu_custom_call.1} parent=0
    #allocation2 [shape = 'u8[16384]{0}', space=vmem, size = 0x4000, scoped, tag = 'output window, operand 0']
    #allocation3 [shape = 's32[2]{0}', space=sflag, size = 0x8, scoped, tag = 'scoped memory for tpu_custom_call.1']
    #allocation4 [shape = 'u8[512]{0}', space=vmem, size = 0x400, scoped, tag = 'output window, operand 1, single buffered']
    #allocation5 [shape = 's32[1]{0}', space=sflag, size = 0x4, scoped, tag = 'scoped memory for tpu_custom_call.1']
    #allocation6 [shape = 'u8[512]{0}', space=vmem, size = 0x400, scoped, tag = 'output window, operand 2, single buffered']
    %10 = vsyncpa [#allocation3], 0
    %s11 = scalar_lea.sflag [#allocation3], 1
    %12 = vsyncpa %s11, 0
    %13 = vsyncpa [#allocation5], 0
    loop: start=0, step=1, limit=5
    $region2: #{tpu_custom_call.1} parent=1 // loop_pre_header
      _
    $region3: #{tpu_custom_call.1} parent=1 // loop_header
      %s15 = sphi 0, %s19
      %p16 = scmp.ge.s32.totalorder %s15, 5
      %s25 = sphi 0, %s27
      %s28 = sphi 0, %s25
      %s29 = sphi 0, %s28
      %s45 = sphi 0, %s29
      %s49 = sphi 0, %s49
      %s51 = sphi 0, %s49
      %s52 = sphi 0, %s51
      %s66 = sphi 0, %s52
      %s72 = sphi 0, %s74
      %s75 = sphi 0, %s72
      %s76 = sphi 0, %s75
      %s92 = sphi 0, %s76
      %s96 = sphi 0, %s96
      %s98 = sphi 0, %s96
      %s99 = sphi 0, %s98
      %s113 = sphi 0, %s99
      %s117 = sphi 0, %s117
      %s119 = sphi 0, %s117
      %s120 = sphi 0, %s119
      %s134 = sphi 0, %s120
    $region4: #{tpu_custom_call.1} parent=1 // loop_header_branch
      %18 = sbr.rel (%p16) target = $region8
    $region5: #{tpu_custom_call.1} parent=1 // loop_body
      %s20 = ssub.s32 %s15, 1
      %s21 = ssub.s32 %s15, 2
      %s22 = sadd.s32 %s15, 1
      %s23 = ssub.s32 %s15, %s22
      %p24 = scmp.eq.s32.totalorder %s23, 0
      %s26 = sadd.s32 %s25, 1
      %s27 = scalar_select %p24, %s25, %s26
      %p30 = pneg %p24
      %p31 = scmp.eq.s32.totalorder %s15, 2
      %p32 = por %p30, %p31
      %p33 = scmp.ne.s32.totalorder %s25, %s28
      %p34 = scmp.eq.s32.totalorder %s15, 0
      %p35 = por %p33, %p34
      %p36 = scmp.ne.s32.totalorder %s25, %s28
      %p37 = scmp.eq.s32.totalorder %s20, 2
      %p38 = por %p36, %p37
      %p39 = scmp.ne.s32.totalorder %s28, %s29
      %p40 = scmp.eq.s32.totalorder %s20, 0
      %p41 = por %p39, %p40
      %p42 = scmp.ne.s32.totalorder %s28, %s29
      %p43 = scmp.eq.s32.totalorder %s21, 2
      %p44 = por %p42, %p43
      %p46 = scmp.ne.s32.totalorder %s29, %s45
      %p47 = scmp.eq.s32.totalorder %s21, 0
      %p48 = por %p46, %p47
      %s50 = sadd.s32 %s49, 1
      %p53 = scmp.eq.s32.totalorder %s15, 2
      %p54 = scmp.ne.s32.totalorder %s49, %s51
      %p55 = scmp.eq.s32.totalorder %s15, 0
      %p56 = por %p54, %p55
      %p57 = scmp.ne.s32.totalorder %s49, %s51
      %p58 = scmp.eq.s32.totalorder %s20, 2
      %p59 = por %p57, %p58
      %p60 = scmp.ne.s32.totalorder %s51, %s52
      %p61 = scmp.eq.s32.totalorder %s20, 0
      %p62 = por %p60, %p61
      %p63 = scmp.ne.s32.totalorder %s51, %s52
      %p64 = scmp.eq.s32.totalorder %s21, 2
      %p65 = por %p63, %p64
      %p67 = scmp.ne.s32.totalorder %s52, %s66
      %p68 = scmp.eq.s32.totalorder %s21, 0
      %p69 = por %p67, %p68
      %s70 = ssub.s32 %s15, %s22
      %p71 = scmp.eq.s32.totalorder %s70, 0
      %s73 = sadd.s32 %s72, 1
      %s74 = scalar_select %p71, %s72, %s73
      %p77 = pneg %p71
      %p78 = scmp.eq.s32.totalorder %s15, 2
      %p79 = por %p77, %p78
      %p80 = scmp.ne.s32.totalorder %s72, %s75
      %p81 = scmp.eq.s32.totalorder %s15, 0
      %p82 = por %p80, %p81
      %p83 = scmp.ne.s32.totalorder %s72, %s75
      %p84 = scmp.eq.s32.totalorder %s20, 2
      %p85 = por %p83, %p84
      %p86 = scmp.ne.s32.totalorder %s75, %s76
      %p87 = scmp.eq.s32.totalorder %s20, 0
      %p88 = por %p86, %p87
      %p89 = scmp.ne.s32.totalorder %s75, %s76
      %p90 = scmp.eq.s32.totalorder %s21, 2
      %p91 = por %p89, %p90
      %p93 = scmp.ne.s32.totalorder %s76, %s92
      %p94 = scmp.eq.s32.totalorder %s21, 0
      %p95 = por %p93, %p94
      %s97 = sadd.s32 %s96, 1
      %p100 = scmp.eq.s32.totalorder %s15, 2
      %p101 = scmp.ne.s32.totalorder %s96, %s98
      %p102 = scmp.eq.s32.totalorder %s15, 0
      %p103 = por %p101, %p102
      %p104 = scmp.ne.s32.totalorder %s96, %s98
      %p105 = scmp.eq.s32.totalorder %s20, 2
      %p106 = por %p104, %p105
      %p107 = scmp.ne.s32.totalorder %s98, %s99
      %p108 = scmp.eq.s32.totalorder %s20, 0
      %p109 = por %p107, %p108
      %p110 = scmp.ne.s32.totalorder %s98, %s99
      %p111 = scmp.eq.s32.totalorder %s21, 2
      %p112 = por %p110, %p111
      %p114 = scmp.ne.s32.totalorder %s99, %s113
      %p115 = scmp.eq.s32.totalorder %s21, 0
      %p116 = por %p114, %p115
      %s118 = sadd.s32 %s117, 1
      %p121 = scmp.eq.s32.totalorder %s15, 2
      %p122 = scmp.ne.s32.totalorder %s117, %s119
      %p123 = scmp.eq.s32.totalorder %s15, 0
      %p124 = por %p122, %p123
      %p125 = scmp.ne.s32.totalorder %s117, %s119
      %p126 = scmp.eq.s32.totalorder %s20, 2
      %p127 = por %p125, %p126
      %p128 = scmp.ne.s32.totalorder %s119, %s120
      %p129 = scmp.eq.s32.totalorder %s20, 0
      %p130 = por %p128, %p129
      %p131 = scmp.ne.s32.totalorder %s119, %s120
      %p132 = scmp.eq.s32.totalorder %s21, 2
      %p133 = por %p131, %p132
      %p135 = scmp.ne.s32.totalorder %s120, %s134
      %p136 = scmp.eq.s32.totalorder %s21, 0
      %p137 = por %p135, %p136
      %p138 = scmp.le.s32.totalorder 1, %s15
      %p139 = scmp.lt.s32.totalorder %s15, 4
      %p140 = pnand %p138, %p139
      %p141 = pneg %p140
      // Predicated region
      $region9: #{tpu_custom_call.1} parent=5 // pred_check
        _
      $region10: #{tpu_custom_call.1} parent=5 // pred_check_branch
        %143 = sbr.rel (%p140) target = $region12
      $region11: #{tpu_custom_call.1} parent=5 // pred_region
        %s144 = ssub.s32 %s15, 1
        // Predicated region
        $region13: #{tpu_custom_call.1} parent=11 // pred_check
          %p145 = pneg %p62
        $region14: #{tpu_custom_call.1} parent=11 // pred_check_branch
          %147 = sbr.rel (%p145) target = $region16
        $region15: #{tpu_custom_call.1} parent=11 // pred_region
          _
        $region16: #{tpu_custom_call.1} parent=11 // pred_fallthru
          _
      $region12: #{tpu_custom_call.1} parent=5 // pred_fallthru
        _
      %p148 = scmp.lt.s32.totalorder %s15, 3
      // Predicated region
      $region17: #{tpu_custom_call.1} parent=5 // pred_check
        %p149 = pneg %p148
      $region18: #{tpu_custom_call.1} parent=5 // pred_check_branch
        %151 = sbr.rel (%p149) target = $region20
      $region19: #{tpu_custom_call.1} parent=5 // pred_region
        // Predicated region
        $region21: #{tpu_custom_call.1} parent=19 // pred_check
          %p152 = pneg %p35
        $region22: #{tpu_custom_call.1} parent=19 // pred_check_branch
          %154 = sbr.rel (%p152) target = $region24
        $region23: #{tpu_custom_call.1} parent=19 // pred_region
          %s155 = smul.u32 2, %s15
          %p156 = scmp.lt.s32.totalorder %s155, 5
          %s157 = scalar_select %p156, %s155, 5
          %s158 = smul.addr %s157, 8
          %s159 = scalar_lea.vmem %s0, %s158
          %s160 = smul.u32 2, %s15
        $region24: #{tpu_custom_call.1} parent=19 // pred_fallthru
          _
      $region20: #{tpu_custom_call.1} parent=5 // pred_fallthru
        _
      %p161 = scmp.le.s32.totalorder 1, %s15
      %p162 = scmp.lt.s32.totalorder %s15, 4
      %p163 = pnand %p161, %p162
      %p164 = pneg %p163
      // Predicated region
      $region25: #{tpu_custom_call.1} parent=5 // pred_check
        _
      $region26: #{tpu_custom_call.1} parent=5 // pred_check_branch
        %166 = sbr.rel (%p163) target = $region28
      $region27: #{tpu_custom_call.1} parent=5 // pred_region
        %s167 = ssub.s32 %s15, 1
        %s168 = smul.u32 2, %s20
        %p169 = scmp.lt.s32.totalorder %s168, 5
        %s170 = scalar_select %p169, %s168, 5
        %s171 = smul.addr %s170, 8
        %s172 = scalar_lea.vmem %s0, %s171
        %p173 = pneg %p41
        %p174 = pneg %p38
        %p175 = pneg %p62
        %p176 = pneg %p59
        %p177 = pneg %p88
        %p178 = pneg %p85
        %s179 = sand.u32 %s75, 1
        %s180 = scalar_lea.sflag [#allocation3], %s179
        %s181 = sand.u32 %s75, 1
        %s182 = smul.addr %s181, 16
        %s183 = scalar_lea.vmem [#allocation2], %s182
        %p184 = pneg %p109
        %p185 = pneg %p106
        %p186 = pneg %p130
        %p187 = pneg %p127
        %s188 = smul.u32 2, %s20
        %p189 = scmp.lt.s32.totalorder %s188, 5
        %s190 = scalar_select %p189, %s188, 5
        %s191 = smul.addr %s190, 8
        %s192 = scalar_lea.vmem %s0, %s191
        %s193 = smul.u32 2, %s20
        %s194 = smul.u32 2, %s20
        %v195 = vld [vmem:[%s192] sm:$0xff]
        %v196 = vld [vmem:[%s192 + $0x8] sm:$0xff]
        %v197 = vld [vmem:[%s1] sm:$0xff]
        %v198 = vld [vmem:[%s1 + $0x8] sm:$0xff]
        %v199 = vld [vmem:[%s1 + $0x10] sm:$0xff]
        %v200 = vld [vmem:[%s1 + $0x18] sm:$0xff]
        %vm201 = vcmask 261120
        %v203 = vsel %vm201, %v195, 0
        %v206 = vsel %vm201, %v196, 0
        %208 = vmatpush.msra.mxu0 0.0
        %209 = vmatpush.msra.mxu0 0.0
        %210 = vmatpush.msra.mxu0 0.0
        %211 = vmatpush.msra.mxu0 0.0
        %212 = vmatpush.msra.mxu0 0.0
        %213 = vmatpush.msra.mxu0 0.0
        %214 = vmatpush.msra.mxu0 0.0
        %215 = vmatpush.msra.mxu0 0.0
        %216 = vmatpush.msra.mxu0 0.0
        %217 = vmatpush.msra.mxu0 0.0
        %218 = vmatpush.msra.mxu0 0.0
        %219 = vmatpush.msra.mxu0 0.0
        %220 = vmatpush.msra.mxu0 %v200
        %221 = vmatpush.msra.mxu0 %v199
        %222 = vmatpush.msra.mxu0 %v198
        %223 = vmatpush.msra.mxu0 %v197
        %224 = vmatmul.f32.gmra.mxu0 %v203
        %v225 = vpop.f32.mrf.mxu0
        %v226 = vadd.f32 0.0, %v225
        %227 = vmatmul.f32.gmra.mxu0 %v206
        %v228 = vpop.f32.mrf.mxu0
        %v229 = vadd.f32 0.0, %v228
        %230 = vdwg.mxu0
        %231 = vst [vmem:[%s183] sm:$0xff] %v226
        %232 = vst [vmem:[%s183 + $0x8] sm:$0xff] %v229
        %p233 = scmp.eq.s32.totalorder %s20, 0
        // Predicated region
        $region29: #{tpu_custom_call.1} parent=27 // pred_check
          %p234 = pneg %p233
        $region30: #{tpu_custom_call.1} parent=27 // pred_check_branch
          %236 = sbr.rel (%p234) target = $region32
        $region31: #{tpu_custom_call.1} parent=27 // pred_region
          %237 = vst [vmem:[#allocation4] sm:$0x1] 0.0
          %238 = vst [vmem:[#allocation6] sm:$0x1] 0.0
        $region32: #{tpu_custom_call.1} parent=27 // pred_fallthru
          _
        %v239 = vld [vmem:[#allocation4] sm:$0x1]
        %v240 = vadd.f32 %v226, %v229
        %v241 = vrot.slane %v240, 4
        %v242 = vadd.f32 %v240, %v241
        %v243 = vrot.slane %v242, 2
        %v244 = vadd.f32 %v242, %v243
        %v245 = vrot.slane %v244, 1
        %v246 = vadd.f32 %v244, %v245
        %v247 = vadd.f32 %v239, %v246
        %248 = vst [vmem:[#allocation4] sm:$0x1] %v247
        %v249 = vld [vmem:[#allocation6] sm:$0x1]
        %v250 = vmul.f32 %v226, %v226
        %v251 = vmul.f32 %v229, %v229
        %v252 = vadd.f32 %v250, %v251
        %v253 = vrot.slane %v252, 4
        %v254 = vadd.f32 %v252, %v253
        %v255 = vrot.slane %v254, 2
        %v256 = vadd.f32 %v254, %v255
        %v257 = vrot.slane %v256, 1
        %v258 = vadd.f32 %v256, %v257
        %v259 = vadd.f32 %v249, %v258
        %260 = vst [vmem:[#allocation6] sm:$0x1] %v259
        %s261 = sand.u32 %s75, 1
        %s262 = scalar_lea.sflag [#allocation3], %s261
        %s263 = sand.u32 %s75, 1
        %s264 = smul.addr %s263, 16
        %s265 = scalar_lea.vmem [#allocation2], %s264
        // Predicated region
        $region33: #{tpu_custom_call.1} parent=27 // pred_check
          %p266 = pneg %p85
        $region34: #{tpu_custom_call.1} parent=27 // pred_check_branch
          %268 = sbr.rel (%p266) target = $region36
        $region35: #{tpu_custom_call.1} parent=27 // pred_region
          %s269 = smul.u32 2, %s20
          %271 = vsyncadd %s262, 0
          %s272 = smul.addr %s269, 8
          %s273 = scalar_lea.hbm %s2, %s272
          %s274 = sshll.u32 %s265, 4
          %s275 = int_to_ptr.vmem [resolvable:$true] %s274
          %s276 = sshll.u32 %s273, 4
          %s277 = int_to_ptr.hbm [resolvable:$true] %s276
          %282 = dma.vmem_to_hbm [thread:$0]  %s275, 256, %s277, %s262, 128, 128, 8
        $region36: #{tpu_custom_call.1} parent=27 // pred_fallthru
          _
        // Predicated region
        $region37: #{tpu_custom_call.1} parent=27 // pred_check
          %p283 = pneg %p106
        $region38: #{tpu_custom_call.1} parent=27 // pred_check_branch
          %285 = sbr.rel (%p283) target = $region40
        $region39: #{tpu_custom_call.1} parent=27 // pred_region
          %287 = vsyncadd [#allocation5], 0
          %s289 = sshll.u32 [#allocation4], 4
          %s290 = int_to_ptr.vmem [resolvable:$true] %s289
          %s291 = sshll.u32 %s3, 4
          %s292 = int_to_ptr.hbm [resolvable:$true] %s291
          %294 = dma.vmem_to_hbm [thread:$0]  %s290, 16, %s292, [#allocation5]
        $region40: #{tpu_custom_call.1} parent=27 // pred_fallthru
          _
        // Predicated region
        $region41: #{tpu_custom_call.1} parent=27 // pred_check
          %p295 = pneg %p127
        $region42: #{tpu_custom_call.1} parent=27 // pred_check_branch
          %297 = sbr.rel (%p295) target = $region44
        $region43: #{tpu_custom_call.1} parent=27 // pred_region
          %299 = vsyncadd [#allocation5], 0
          %s301 = sshll.u32 [#allocation6], 4
          %s302 = int_to_ptr.vmem [resolvable:$true] %s301
          %s303 = sshll.u32 %s4, 4
          %s304 = int_to_ptr.hbm [resolvable:$true] %s303
          %306 = dma.vmem_to_hbm [thread:$0]  %s302, 16, %s304, [#allocation5]
        $region44: #{tpu_custom_call.1} parent=27 // pred_fallthru
          _
        // Predicated region
        $region45: #{tpu_custom_call.1} parent=27 // pred_check
          %p307 = pneg %p106
        $region46: #{tpu_custom_call.1} parent=27 // pred_check_branch
          %309 = sbr.rel (%p307) target = $region48
        $region47: #{tpu_custom_call.1} parent=27 // pred_region
          %311 = dma.done [#allocation5], 16
        $region48: #{tpu_custom_call.1} parent=27 // pred_fallthru
          _
        // Predicated region
        $region49: #{tpu_custom_call.1} parent=27 // pred_check
          %p312 = pneg %p127
        $region50: #{tpu_custom_call.1} parent=27 // pred_check_branch
          %314 = sbr.rel (%p312) target = $region52
        $region51: #{tpu_custom_call.1} parent=27 // pred_region
          %316 = dma.done [#allocation5], 16
        $region52: #{tpu_custom_call.1} parent=27 // pred_fallthru
          _
      $region28: #{tpu_custom_call.1} parent=5 // pred_fallthru
        _
      %p317 = scmp.le.s32.totalorder 2, %s15
      // Predicated region
      $region53: #{tpu_custom_call.1} parent=5 // pred_check
        %p318 = pneg %p317
      $region54: #{tpu_custom_call.1} parent=5 // pred_check_branch
        %320 = sbr.rel (%p318) target = $region56
      $region55: #{tpu_custom_call.1} parent=5 // pred_region
        %s321 = ssub.s32 %s15, 2
        // Predicated region
        $region57: #{tpu_custom_call.1} parent=55 // pred_check
          %p322 = pneg %p91
        $region58: #{tpu_custom_call.1} parent=55 // pred_check_branch
          %324 = sbr.rel (%p322) target = $region60
        $region59: #{tpu_custom_call.1} parent=55 // pred_region
          %s325 = sand.u32 %s76, 1
          %s326 = scalar_lea.sflag [#allocation3], %s325
          %s327 = sand.u32 %s76, 1
          %s328 = smul.addr %s327, 16
          %s329 = scalar_lea.vmem [#allocation2], %s328
          %331 = dma.done %s326, 256
        $region60: #{tpu_custom_call.1} parent=55 // pred_fallthru
          _
      $region56: #{tpu_custom_call.1} parent=5 // pred_fallthru
        _
    $region6: #{tpu_custom_call.1} parent=1 // loop_footer
      %s19 = sadd.s32 1, %s15
    $region7: #{tpu_custom_call.1} parent=1 // loop_footer_branch
      %14 = sbr.rel target = $region3
    $region8: #{tpu_custom_call.1} parent=1 // loop_exit
      _
    %332 = vsyncpa [#allocation3], 1
    %s333 = scalar_lea.sflag [#allocation3], 1
    %334 = vsyncpa %s333, 1
    %335 = vsyncpa [#allocation5], 1

</llo_original>
